<compile_context>
chip_gen: v7x
topology: tpu7x:2x2x1
jax: 0.10.0
libtpu: 0.0.40
codegen_flags: <defaults>
</compile_context>

<pallas_src>
import functools

import jax
import jax.numpy as jnp
from jax.experimental import pallas as pl
from jax.experimental.pallas import tpu as pltpu


# ----------------------------- static geometry ------------------------------
IH = IW = 28                 # input spatial size (fc1 expects 320 = 20*4*4)
KS = 5                       # conv kernel size
C1 = 10                      # conv1 out channels (fixed by the module)
C2 = 20                      # conv2 out channels
NF1 = 50                     # fc1 out features
CONV1 = IH - KS + 1          # 24
POOL1 = CONV1 // 2           # 12
CONV2 = POOL1 - KS + 1       # 8
POOL2 = CONV2 // 2           # 4
N1 = CONV1 * CONV1           # 576 conv1 output rows per image
P2R = POOL1 * POOL1          # 144 pool1 rows per image
P2PAD = 160                  # p2 buffer rows (>= 95 + 52 + 1; tail zeroed)
N2 = 96                      # conv2 acc rows (>= max valid wide row 91, %8==0)
PITCH3 = POOL2 * POOL2       # 16 pool2 rows per image (fc1 spatial positions)
LANES = 128                  # lane-dense padded channel width
TPB2 = 12                    # conv2 taps per K block (12 * 10 = 120 lanes)
NKB2 = 3                     # ceil(25 / 12) K blocks for conv2


# ------------------- runtime probe: pltpu.roll direction --------------------
def _roll_probe_kernel(x_ref, o_ref):
    o_ref[...] = pltpu.roll(x_ref[...], shift=1, axis=1)


_ROLL_SIGN_CACHE = None


def _roll_sign():
    """+1 if pltpu.roll moves lane i -> lane i+shift (np.roll convention), else -1."""
    global _ROLL_SIGN_CACHE
    if _ROLL_SIGN_CACHE is None:
        vmem = pl.BlockSpec(memory_space=pltpu.MemorySpace.VMEM)
        x = jax.lax.broadcasted_iota(jnp.float32, (8, LANES), 1)
        y = pl.pallas_call(
            _roll_probe_kernel,
            out_shape=jax.ShapeDtypeStruct((8, LANES), jnp.float32),
            in_specs=[vmem], out_specs=vmem,
        )(x)
        _ROLL_SIGN_CACHE = 1 if int(y[0, 1]) == 0 else -1
    return _ROLL_SIGN_CACHE


# ------------------------------- fused kernel -------------------------------
def _cnn_fused_kernel(xp_ref, w1_ref, b1_ref, w2_ref, b2_ref,
                      wf1_ref, bf1_ref, wf2_ref, bf2_ref,
                      out_ref,
                      a1_ref, p2_ref, a2_ref, p3_ref, *, roll_sign):
    bf16 = jnp.bfloat16
    f32 = jnp.float32

    def lane_shift(delta):
        # shift amount that moves lane c -> lane c+delta regardless of the
        # hardware rotate convention (probed in the wrapper).
        return delta % LANES if roll_sign > 0 else (-delta) % LANES

    # ---------------- conv1: one K-packed im2col matmul + bias + ReLU ------
    y = jnp.dot(xp_ref[...], w1_ref[...], preferred_element_type=f32)
    a1_ref[...] = jnp.maximum(y + b1_ref[...], 0.0)       # (576, 128) f32

    # ---------------- pool1: 2x2/2 max fused into the stride-2 gather ------
    # Only the 144 kept rows are max-reduced/stored (no full-width pool pass).
    p2_ref[pl.ds(P2R, P2PAD - P2R), :] = jnp.zeros((P2PAD - P2R, LANES), f32)
    for ph in range(POOL1):
        base = 2 * ph * CONV1
        m = jnp.maximum(
            jnp.maximum(a1_ref[pl.ds(base, POOL1, stride=2), :],
                        a1_ref[pl.ds(base + 1, POOL1, stride=2), :]),
            jnp.maximum(a1_ref[pl.ds(base + CONV1, POOL1, stride=2), :],
                        a1_ref[pl.ds(base + CONV1 + 1, POOL1, stride=2), :]))
        p2_ref[pl.ds(ph * POOL1, POOL1), :] = m            # rows ph*12 + pw

    # ---------------- conv2: taps K-packed onto lanes via pltpu.roll -------
    # 12 taps x 10 in-channels = 120 K lanes per block -> 3 matmuls instead of
    # 25; the f32 accumulator (96x128 = 12 vregs) stays in registers.
    acc = None
    for kb in range(NKB2):
        lhs = None
        for j in range(min(TPB2, KS * KS - kb * TPB2)):
            t = kb * TPB2 + j
            di, dj = t // KS, t % KS
            v = p2_ref[pl.ds(di * POOL1 + dj, N2), :]
            if j:
                v = pltpu.roll(v, shift=lane_shift(C1 * j), axis=1)
            lhs = v if lhs is None else lhs + v
        part = jnp.dot(lhs.astype(bf16), w2_ref[kb], preferred_element_type=f32)
        acc = part if acc is None else acc + part
    # TODO(synk): conv2_drop (Dropout2d) is identity -- eval-mode semantics.
    a2_ref[...] = jnp.maximum(acc + b2_ref[...], 0.0)      # (96, 128) f32

    # ---------------- pool2: 2x2/2 max fused into the stride-2 gather ------
    for qh in range(POOL2):
        base = 2 * qh * POOL1
        m = jnp.maximum(
            jnp.maximum(a2_ref[pl.ds(base, POOL2, stride=2), :],
                        a2_ref[pl.ds(base + 1, POOL2, stride=2), :]),
            jnp.maximum(a2_ref[pl.ds(base + POOL1, POOL2, stride=2), :],
                        a2_ref[pl.ds(base + POOL1 + 1, POOL2, stride=2), :]))
        p3_ref[pl.ds(qh * POOL2, POOL2), :] = m            # rows qh*4 + qw

    # ---------------- fc1 + ReLU (spatial-major weights absorb NCHW flatten)
    # 16 tiny M=1 matmuls; negligible FLOPs (review: further packing is
    # low-priority), bf16 operands halve wf1 residency/DMA.
    y1 = None
    for s in range(PITCH3):
        t = jnp.dot(p3_ref[pl.ds(s, 1), :].astype(bf16), wf1_ref[s],
                    preferred_element_type=f32)
        y1 = t if y1 is None else y1 + t
    y1 = jnp.maximum(y1 + bf1_ref[...], 0.0)               # (1, 128) f32
    # TODO(synk): F.dropout(p=0.5) is identity -- eval-mode semantics.

    # ---------------- fc2 (kept f32; trivial cost) --------------------------
    y2 = jnp.dot(y1, wf2_ref[...], preferred_element_type=f32) + bf2_ref[...]
    out_ref[...] = jnp.broadcast_to(y2, (8, LANES))[None]  # (1, 8, 128)


# ----------------------- wrapper: layout / param prep -----------------------
def _prepare_operands(x_nchw, params):
    """Lay out the input and parameters for the fused kernel (KB-scale ops)."""
    B, cin, H, W = x_nchw.shape
    assert (H, W) == (IH, IW), "fc1 expects 320 features -> 28x28 spatial input"
    assert params["conv1_w"].shape[0] == C1 and params["conv2_w"].shape[0] == C2
    nout = params["fc2_b"].shape[0]
    assert max(C1, C2, NF1, nout) <= LANES

    bf16 = jnp.bfloat16
    f32 = jnp.float32

    K1 = KS * KS * cin
    K1P = ((K1 + LANES - 1) // LANES) * LANES

    # conv1 im2col: rows b*576 + h*24 + w, K index = (di*5+dj)*cin + c.
    taps = [x_nchw[:, :, di:di + CONV1, dj:dj + CONV1]
            for di in range(KS) for dj in range(KS)]        # each (B,cin,24,24)
    xp = jnp.stack(taps, axis=-1).transpose(0, 2, 3, 4, 1)  # (B,24,24,25,cin)
    xp = xp.reshape(B * N1, K1)
    xp = jnp.pad(xp, ((0, 0), (0, K1P - K1))).astype(bf16)

    # conv1 weights: row (di*5+dj)*cin + c  -> lane-dense (K1P, 128).
    w1 = params["conv1_w"].transpose(2, 3, 1, 0).reshape(K1, C1)
    w1 = jnp.pad(w1, ((0, K1P - K1), (0, LANES - C1))).astype(bf16)
    b1 = jnp.pad(params["conv1_b"], (0, LANES - C1)).reshape(1, LANES).astype(f32)

    # conv2 weights, K-packed: block kb, row j*C1 + c  <-  tap kb*12+j, in-ch c.
    w2 = params["conv2_w"].transpose(2, 3, 1, 0).reshape(KS * KS, C1, C2)
    w2 = jnp.pad(w2, ((0, NKB2 * TPB2 - KS * KS), (0, 0), (0, 0)))
    w2 = w2.reshape(NKB2, TPB2 * C1, C2)
    w2 = jnp.pad(w2, ((0, 0), (0, LANES - TPB2 * C1), (0, LANES - C2))).astype(bf16)
    b2 = jnp.pad(params["conv2_b"], (0, LANES - C2)).reshape(1, LANES).astype(f32)

    # fc1 weights stored (320, 50) with row f = c*16 + s (PyTorch NCHW flatten);
    # re-pack spatial-major -> (16, 128, 128) so no activation transpose needed.
    wf1 = params["fc1_w"].reshape(C2, PITCH3, NF1).transpose(1, 0, 2)
    wf1 = jnp.pad(wf1, ((0, 0), (0, LANES - C2), (0, LANES - NF1))).astype(bf16)
    bf1 = jnp.pad(params["fc1_b"], (0, LANES - NF1)).reshape(1, LANES).astype(f32)

    # fc2 weights (50, nout) -> (128, 128) f32.
    wf2 = jnp.pad(params["fc2_w"], ((0, LANES - NF1), (0, LANES - nout))).astype(f32)
    bf2 = jnp.pad(params["fc2_b"], (0, LANES - nout)).reshape(1, LANES).astype(f32)

    return (xp, w1, b1, w2, b2, wf1, bf1, wf2, bf2), K1P, nout


@functools.partial(jax.jit, static_argnums=(2,))
def _cnn_forward_jit(x_nchw, params, roll_sign):
    B = x_nchw.shape[0]
    operands, K1P, nout = _prepare_operands(x_nchw, params)

    grid_spec = pltpu.PrefetchScalarGridSpec(
        num_scalar_prefetch=0,
        grid=(B,),
        in_specs=[
            # per-image im2col block: double-buffered / prefetched by Pallas
            pl.BlockSpec((N1, K1P), lambda b: (b, 0)),
            # weights & biases: constant index_maps -> DMA'd once, stay resident
            pl.BlockSpec((K1P, LANES), lambda b: (0, 0)),
            pl.BlockSpec((1, LANES), lambda b: (0, 0)),
            pl.BlockSpec((NKB2, LANES, LANES), lambda b: (0, 0, 0)),
            pl.BlockSpec((1, LANES), lambda b: (0, 0)),
            pl.BlockSpec((PITCH3, LANES, LANES), lambda b: (0, 0, 0)),
            pl.BlockSpec((1, LANES), lambda b: (0, 0)),
            pl.BlockSpec((LANES, LANES), lambda b: (0, 0)),
            pl.BlockSpec((1, LANES), lambda b: (0, 0)),
        ],
        out_specs=pl.BlockSpec((1, 8, LANES), lambda b: (b, 0, 0)),
        scratch_shapes=[
            pltpu.VMEM((N1, LANES), jnp.float32),     # conv1 out (pool-1 input)
            pltpu.VMEM((P2PAD, LANES), jnp.float32),  # pool-1 out (+zero pad rows)
            pltpu.VMEM((N2, LANES), jnp.float32),     # conv2 out (pool-2 input)
            pltpu.VMEM((PITCH3, LANES), jnp.float32),  # pool-2 out (fc input)
        ],
    )

    out = pl.pallas_call(
        functools.partial(_cnn_fused_kernel, roll_sign=roll_sign),
        out_shape=jax.ShapeDtypeStruct((B, 8, LANES), jnp.float32),
        grid_spec=grid_spec,
        compiler_params=pltpu.CompilerParams(
            dimension_semantics=("parallel",),        # megacore batch split on v7x
            vmem_limit_bytes=32 * 1024 * 1024,        # safe on 64 MiB (v7x) & 128 MiB
        ),
    )(*operands)
    return out[:, 0, :nout]


def cnn_forward(x_nchw, params):
    """Forward pass matching the PyTorch CNN.forward (eval mode)."""
    return _cnn_forward_jit(x_nchw, params, _roll_sign())


# ----------------------------- pure-JAX reference ---------------------------
def cnn_reference(x_nchw, params):
    hi = jax.lax.Precision.HIGHEST
    y = jax.lax.conv_general_dilated(
        x_nchw, params["conv1_w"], (1, 1), "VALID",
        dimension_numbers=("NCHW", "OIHW", "NCHW"), precision=hi)
    y = jnp.maximum(y + params["conv1_b"][None, :, None, None], 0.0)
    y = jax.lax.reduce_window(y, -jnp.inf, jax.lax.max,
                              (1, 1, 2, 2), (1, 1, 2, 2), "VALID")
    y = jax.lax.conv_general_dilated(
        y, params["conv2_w"], (1, 1), "VALID",
        dimension_numbers=("NCHW", "OIHW", "NCHW"), precision=hi)
    y = jnp.maximum(y + params["conv2_b"][None, :, None, None], 0.0)
    y = jax.lax.reduce_window(y, -jnp.inf, jax.lax.max,
                              (1, 1, 2, 2), (1, 1, 2, 2), "VALID")
    y = y.reshape(y.shape[0], -1)
    y = jnp.maximum(y @ params["fc1_w"] + params["fc1_b"], 0.0)
    y = y @ params["fc2_w"] + params["fc2_b"]
    return y


# --------------------------------- main -------------------------------------
def init_params(key, input_channels, output_channels):
    ks = jax.random.split(key, 8)
    def w(k, shape, fan_in):
        return jax.random.normal(k, shape, jnp.float32) / jnp.sqrt(fan_in)
    return {
        "conv1_w": w(ks[0], (C1, input_channels, 5, 5), input_channels * 25),
        "conv1_b": w(ks[1], (C1,), 25.0),
        "conv2_w": w(ks[2], (C2, C1, 5, 5), C1 * 25),
        "conv2_b": w(ks[3], (C2,), 250.0),
        "fc1_w":   w(ks[4], (320, NF1), 320.0),   # stored (in, out)
        "fc1_b":   w(ks[5], (NF1,), 320.0),
        "fc2_w":   w(ks[6], (NF1, output_channels), 50.0),
        "fc2_b":   w(ks[7], (output_channels,), 50.0),
    }


if __name__ == "__main__":
    input_channels, output_channels = 1, 10
    B = 2
    key = jax.random.PRNGKey(0)
    kx, kp = jax.random.split(key)
    # fc1 expects 320 = 20*4*4 features -> 28x28 spatial input (MNIST-sized).
    x = jax.random.normal(kx, (B, input_channels, IH, IW), jnp.float32)
    params = init_params(kp, input_channels, output_channels)

    out = jax.block_until_ready(cnn_forward(x, params))
    assert out.shape == (B, output_channels)

    ref = jax.block_until_ready(cnn_reference(x, params))
    err = jnp.max(jnp.abs(out - ref))
    # tolerance sized for bf16 matmul operands with f32 accumulation
    assert jnp.allclose(out, ref, rtol=1e-2, atol=3e-2), f"max abs err {err}"

    print("KERNEL_OK")
</pallas_src>

<mosaic_0001>
module attributes {stable_mosaic.version = 11 : i64} {
  func.func @_roll_probe_kernel(%arg0: memref<8x128xf32, #tpu.memory_space<vmem>>, %arg1: memref<8x128xf32, #tpu.memory_space<vmem>>) attributes {dimension_semantics = [], scalar_prefetch = 0 : i64, scratch_operands = 0 : i64, tpu.core_type = #tpu.core_type<tc>} {
    %c0 = arith.constant 0 : index
    %c0_0 = arith.constant 0 : index
    %0 = vector.load %arg0[%c0, %c0_0] : memref<8x128xf32, #tpu.memory_space<vmem>>, vector<8x128xf32>
    %c1_i32 = arith.constant 1 : i32
    %1 = tpu.dynamic_rotate %0 by %c1_i32 dim 1 : vector<8x128xf32>, i32 -> vector<8x128xf32>
    %c0_1 = arith.constant 0 : index
    %c0_2 = arith.constant 0 : index
    %2 = vector.load %arg1[%c0_1, %c0_2] : memref<8x128xf32, #tpu.memory_space<vmem>>, vector<8x128xf32>
    tpu.vector_store %arg1[%c0_1, %c0_2], %1 {strides = array<i32>} : memref<8x128xf32, #tpu.memory_space<vmem>>, vector<8x128xf32>,
    return
  }
}

</mosaic_0001>

<llo_original>
// kernel: tpu_custom_call.1
$region0: #{tpu_custom_call.1}
  #allocation0 [shape = 'u32[]', space=smem, size = 0x4, offset = 0x4, fixed_abs, tag = 'smem constant byte address 0x4 - core index']
  #allocation1 [shape = 'u32[144,128]{1,0:T(1,128)}', space=vmem, size = 0x12000, scoped, tag = 'internal scratch']
  %s0 = inlined_call_operand.hbm [shape: f32[8,128], index: 0, kind: input, shape index: {}]
  %s1 = inlined_call_operand.hbm [shape: f32[8,128], index: 1, kind: output, shape index: {}]
  %s2 = sld [smem:[#allocation0]]
  $region18: #{tpu_custom_call.1} parent=0
    _
  %s4 = ssub.s32 1, %s2
  %s5 = scalar_select 0, %s4, %s2
  $region1: #{tpu_custom_call.1} parent=0
    #allocation2 [shape = 'u8[4096]{0}', space=vmem, size = 0x1000, scoped, tag = 'input window, operand 0, single buffered']
    #allocation3 [shape = 's32[1]{0}', space=sflag, size = 0x4, scoped, tag = 'scoped memory for tpu_custom_call.1']
    #allocation4 [shape = 's32[1]{0}', space=sflag, size = 0x4, scoped, tag = 'scoped memory for tpu_custom_call.1']
    #allocation5 [shape = 'u8[4096]{0}', space=vmem, size = 0x1000, scoped, tag = 'output window, operand 0, single buffered']
    %6 = vsyncpa [#allocation3], 0
    %7 = vsyncpa [#allocation4], 0
    // Predicated region
    $region2: #{tpu_custom_call.1} parent=1 // pred_check
      _
    $region3: #{tpu_custom_call.1} parent=1 // pred_check_branch
      %9 = sbr.rel (0) target = $region5
    $region4: #{tpu_custom_call.1} parent=1 // pred_region
      %s11 = ssub.s32 128, 128
      %12 = vsyncadd [#allocation3], %s11
      %s14 = sshll.u32 [#allocation2], 4
      %s15 = int_to_ptr.vmem [resolvable:$true] %s14
      %17 = dma.hbm_to_vmem [thread:$0]  %s0, 128, %s15, [#allocation3]
    $region5: #{tpu_custom_call.1} parent=1 // pred_fallthru
      _
    // Predicated region
    $region6: #{tpu_custom_call.1} parent=1 // pred_check
      _
    $region7: #{tpu_custom_call.1} parent=1 // pred_check_branch
      %19 = sbr.rel (0) target = $region9
    $region8: #{tpu_custom_call.1} parent=1 // pred_region
      %20 = dma.done [#allocation3], 128
    $region9: #{tpu_custom_call.1} parent=1 // pred_fallthru
      _
    %v21 = vld [vmem:[#allocation2] sm:$0xff]
    %22 = vrot.lane.b32.xlu0 %v21, 1
    %v23 = vpop.permute.xlu0 %22
    %24 = vst [vmem:[#allocation5] sm:$0xff] %v23
    // Predicated region
    $region10: #{tpu_custom_call.1} parent=1 // pred_check
      _
    $region11: #{tpu_custom_call.1} parent=1 // pred_check_branch
      %26 = sbr.rel (0) target = $region13
    $region12: #{tpu_custom_call.1} parent=1 // pred_region
      %s28 = ssub.s32 128, 128
      %29 = vsyncadd [#allocation4], %s28
      %s31 = sshll.u32 [#allocation5], 4
      %s32 = int_to_ptr.vmem [resolvable:$true] %s31
      %34 = dma.vmem_to_hbm [thread:$0]  %s32, 128, %s1, [#allocation4]
    $region13: #{tpu_custom_call.1} parent=1 // pred_fallthru
      _
    // Predicated region
    $region14: #{tpu_custom_call.1} parent=1 // pred_check
      _
    $region15: #{tpu_custom_call.1} parent=1 // pred_check_branch
      %36 = sbr.rel (0) target = $region17
    $region16: #{tpu_custom_call.1} parent=1 // pred_region
      %37 = dma.done [#allocation4], 128
    $region17: #{tpu_custom_call.1} parent=1 // pred_fallthru
      _
    %38 = vsyncpa [#allocation3], 1
    %39 = vsyncpa [#allocation4], 1

</llo_original>
